<compile_context>
chip_gen: v6e
topology: v6e:2x2x1
jax: 0.10.0
libtpu: 0.0.40
codegen_flags: <defaults>
</compile_context>

<pallas_src>
import functools
import math

import jax
import jax.numpy as jnp
from jax.experimental import pallas as pl
from jax.experimental.pallas import tpu as pltpu


def _round_up(a, b):
    return (a + b - 1) // b * b


_VMEM_LIMIT = 64 * 1024 * 1024  # explicit scoped-VMEM budget (safe for v7x's 64 MiB/TC)


# ----------------------------------------------------------------------------
# Kernel 1: node projections  q/k/v = x@W+b  and skip = x@Ws+bs   (grid over N tiles)
# ----------------------------------------------------------------------------
def _proj_kernel(x_ref, wq_ref, bq_ref, wk_ref, bk_ref, wv_ref, bv_ref,
                 ws_ref, bs_ref, q_ref, k_ref, v_ref, s_ref):
    f32 = jnp.float32
    x = x_ref[...]
    q_ref[...] = jnp.dot(x, wq_ref[...], preferred_element_type=f32) + bq_ref[...]
    k_ref[...] = jnp.dot(x, wk_ref[...], preferred_element_type=f32) + bk_ref[...]
    v_ref[...] = jnp.dot(x, wv_ref[...], preferred_element_type=f32) + bv_ref[...]
    s_ref[...] = jnp.dot(x, ws_ref[...], preferred_element_type=f32) + bs_ref[...]


def _project(x, wq, bq, wk, bk, wv, bv, ws, bs, *, tile_n):
    n_pad, fin = x.shape
    hc = wq.shape[1]
    ds = ws.shape[1]
    n_tiles = n_pad // tile_n

    def full(shape):
        return pl.BlockSpec(shape, lambda i: (0, 0))

    node_out = lambda w: pl.BlockSpec((tile_n, w), lambda i: (i, 0))

    return pl.pallas_call(
        _proj_kernel,
        out_shape=(jax.ShapeDtypeStruct((n_pad, hc), jnp.float32),
                   jax.ShapeDtypeStruct((n_pad, hc), jnp.float32),
                   jax.ShapeDtypeStruct((n_pad, hc), jnp.float32),
                   jax.ShapeDtypeStruct((n_pad, ds), jnp.float32)),
        grid_spec=pltpu.PrefetchScalarGridSpec(
            num_scalar_prefetch=0,
            grid=(n_tiles,),
            in_specs=[pl.BlockSpec((tile_n, fin), lambda i: (i, 0)),
                      full((fin, hc)), full((1, hc)),
                      full((fin, hc)), full((1, hc)),
                      full((fin, hc)), full((1, hc)),
                      full((fin, ds)), full((1, ds))],
            out_specs=(node_out(hc), node_out(hc), node_out(hc), node_out(ds))),
        compiler_params=pltpu.CompilerParams(
            dimension_semantics=("parallel",),
            vmem_limit_bytes=_VMEM_LIMIT),
    )(x, wq, bq, wk, bk, wv, bv, ws, bs)


# ----------------------------------------------------------------------------
# Kernel 2: edge attention / aggregation for one TransformerConv layer
# (fused TimeEncoder + edge projection + online segment softmax + skip + ReLU)
# ----------------------------------------------------------------------------
def _attn_kernel(rel_t_ref, msg_ref, src_ref, dst_ref, q_ref, k_ref, v_ref,
                 skip_ref, wt_ref, bt_ref, wet_ref, wem_ref, ssum_ref, sexp_ref,
                 out_ref, m_sc, den_sc, acc_sc,
                 *, heads, head_ch, tile_n, compute_dtype):
    f32 = jnp.float32
    n_idx = pl.program_id(0)
    e_idx = pl.program_id(1)

    @pl.when(e_idx == 0)
    def _init():
        m_sc[...] = jnp.full_like(m_sc, -1e30)
        den_sc[...] = jnp.zeros_like(den_sc)
        acc_sc[...] = jnp.zeros_like(acc_sc)

    # Fused TimeEncoder (cos goes to the EUP slot) + split lin_edge projection.
    t_enc = jnp.cos(rel_t_ref[...] * wt_ref[...] + bt_ref[...])               # [tE, td]
    e_proj = (jnp.dot(t_enc, wet_ref[...], preferred_element_type=f32) +
              jnp.dot(msg_ref[...], wem_ref[...], preferred_element_type=f32))  # [tE, HC]

    tile_e = rel_t_ref.shape[0]
    n_pad = k_ref.shape[0]
    src = src_ref[...]                                                        # [tE, 1] int32
    dst = dst_ref[...]                                                        # [tE, 1] int32

    # In-kernel one-hot tiles (never touch HBM). One-hot 0/1 is exact in bf16.
    iota_n = jax.lax.broadcasted_iota(jnp.int32, (tile_e, n_pad), 1)
    src_oh = (iota_n == src).astype(compute_dtype)                            # [tE, N]
    iota_t = jax.lax.broadcasted_iota(jnp.int32, (tile_e, tile_n), 1)
    dst_oh = (iota_t == (dst - n_idx * tile_n)).astype(compute_dtype)         # [tE, tN]

    k_e = jnp.dot(src_oh, k_ref[...].astype(compute_dtype),
                  preferred_element_type=f32) + e_proj                        # key_j + edge
    v_e = jnp.dot(src_oh, v_ref[...].astype(compute_dtype),
                  preferred_element_type=f32) + e_proj                        # value_j + edge
    q_e = jnp.dot(dst_oh, q_ref[...].astype(compute_dtype),
                  preferred_element_type=f32)                                 # query_i

    # Per-edge, per-head attention logits (score math kept in f32).
    scores = jnp.dot(q_e * k_e, ssum_ref[...],
                     preferred_element_type=f32) * (1.0 / math.sqrt(head_ch))  # [tE, H]

    # Flash-style running per-head max: a common shift per head leaves softmax ratios
    # exact (only underflow differs from PyG's per-destination max).
    m_prev = m_sc[...]                                                        # [1, H]
    m_new = jnp.maximum(m_prev, jnp.max(scores, axis=0, keepdims=True))       # [1, H]
    rescale = jnp.exp(m_prev - m_new)                                         # [1, H]
    ex = jnp.exp(scores - m_new)                                              # [tE, H]
    ex_full = jnp.dot(ex, sexp_ref[...], preferred_element_type=f32)          # [tE, HC]
    rescale_full = jnp.dot(rescale, sexp_ref[...], preferred_element_type=f32)  # [1, HC]

    # Scatter-add into destination rows of this node tile: contract over the edge axis.
    e_contract = (((0,), (0,)), ((), ()))
    den_sc[...] = den_sc[...] * rescale + jax.lax.dot_general(
        dst_oh, ex.astype(compute_dtype), e_contract, preferred_element_type=f32)
    acc_sc[...] = acc_sc[...] * rescale_full + jax.lax.dot_general(
        dst_oh, (v_e * ex_full).astype(compute_dtype), e_contract,
        preferred_element_type=f32)
    m_sc[...] = m_new

    @pl.when(e_idx == pl.num_programs(1) - 1)
    def _finalize():
        den_full = jnp.dot(den_sc[...], sexp_ref[...], preferred_element_type=f32)
        attn = acc_sc[...] * pl.reciprocal(den_full + 1e-16, approx=True)
        out_ref[...] = jnp.maximum(attn + skip_ref[...], 0.0)                 # fused F.relu


def _attention(rel_t, msg, src, dst, q, k, v, skip, lp, *, heads, head_ch,
               tile_n, tile_e, compute_dtype):
    n_pad, hc = q.shape
    e_pad = rel_t.shape[0]
    td = lp["wt"].shape[1]
    dm = msg.shape[1]
    dout = skip.shape[1]
    n_tiles = n_pad // tile_n
    e_tiles = e_pad // tile_e

    edge = lambda w: pl.BlockSpec((tile_e, w), lambda n, e: (e, 0))
    node = lambda w: pl.BlockSpec((tile_n, w), lambda n, e: (n, 0))
    full = lambda r, c: pl.BlockSpec((r, c), lambda n, e: (0, 0))

    kern = functools.partial(_attn_kernel, heads=heads, head_ch=head_ch,
                             tile_n=tile_n, compute_dtype=compute_dtype)
    return pl.pallas_call(
        kern,
        out_shape=jax.ShapeDtypeStruct((n_pad, dout), jnp.float32),
        grid_spec=pltpu.PrefetchScalarGridSpec(
            num_scalar_prefetch=0,
            grid=(n_tiles, e_tiles),
            in_specs=[edge(1), edge(dm), edge(1), edge(1),
                      node(hc), full(n_pad, hc), full(n_pad, hc), node(dout),
                      full(1, td), full(1, td), full(td, hc), full(dm, hc),
                      full(hc, heads), full(heads, hc)],
            out_specs=pl.BlockSpec((tile_n, dout), lambda n, e: (n, 0)),
            scratch_shapes=[pltpu.VMEM((1, heads), jnp.float32),        # running max
                            pltpu.VMEM((tile_n, heads), jnp.float32),   # softmax denom
                            pltpu.VMEM((tile_n, hc), jnp.float32)]),    # unnormalized acc
        compiler_params=pltpu.CompilerParams(
            dimension_semantics=("parallel", "arbitrary"),
            vmem_limit_bytes=_VMEM_LIMIT),
    )(rel_t, msg, src, dst, q, k, v, skip,
      lp["wt"], lp["bt"], lp["wet"], lp["wem"], lp["ssum"], lp["sexp"])


# ----------------------------------------------------------------------------
# One TransformerConv layer (PyG semantics, dropout=0, beta=False, root_weight=True)
# ----------------------------------------------------------------------------
def _conv_layer(x, rel_t, msg, src, dst, p, tp, *, heads, out_ch, concat,
                tile_n, tile_e, compute_dtype):
    # TODO(synk): concat=False with heads>1 (mean over heads) is not needed by this model.
    assert concat or heads == 1
    hc = heads * out_ch
    hc_pad = _round_up(hc, 128)          # lane-dense output slab (conv2: 16 -> 128)
    td = tp["w"].shape[1]

    padc = lambda a: jnp.pad(a, ((0, 0), (0, hc_pad - a.shape[1])))
    wq, bq = padc(p["wq"]), padc(p["bq"])
    wk, bk = padc(p["wk"]), padc(p["bk"])
    wv, bv = padc(p["wv"]), padc(p["bv"])
    we = padc(p["we"])
    ws, bs = padc(p["ws"]), padc(p["bs"])
    wet, wem = we[:td], we[td:]          # split lin_edge: time rows / msg rows

    # Head-grouping matrices, hoisted out of the kernel (stay resident in VMEM).
    cid = jnp.arange(hc_pad)
    hid = jnp.where(cid < hc, cid // out_ch, heads)      # padded channels -> no head
    ssum = (hid[:, None] == jnp.arange(heads)[None, :]).astype(jnp.float32)  # [HCp, H]
    sexp = ssum.T                                                            # [H, HCp]

    q, k, v, skip = _project(x, wq, bq, wk, bk, wv, bv, ws, bs, tile_n=tile_n)
    lp = dict(wt=tp["w"], bt=tp["b"], wet=wet, wem=wem, ssum=ssum, sexp=sexp)
    out = _attention(rel_t, msg, src, dst, q, k, v, skip, lp,
                     heads=heads, head_ch=out_ch,
                     tile_n=tile_n, tile_e=tile_e, compute_dtype=compute_dtype)
    return out, (hc if concat else out_ch)


# ----------------------------------------------------------------------------
# GraphAttentionEmbedding forward
# ----------------------------------------------------------------------------
def graph_attention_embedding(x, last_update, edge_index, t, msg, params, *,
                              node_tile=256, edge_tile=512,
                              compute_dtype=jnp.float32):
    # compute_dtype=jnp.bfloat16 doubles MXU rate / halves VMEM on v6e/v7x (one-hots exact).
    N, _ = x.shape
    E = edge_index.shape[1]
    heads = params["heads"]
    C = params["out_channels"]

    src = edge_index[0].astype(jnp.int32)
    dst = edge_index[1].astype(jnp.int32)
    rel_t = (last_update[src] - t).astype(jnp.float32)[:, None]               # [E, 1]

    tile_n = min(node_tile, _round_up(N, 8))
    n_pad = _round_up(N, tile_n)
    tile_e = min(edge_tile, _round_up(E, 8))
    e_pad = _round_up(E, tile_e)

    x_p = jnp.pad(x.astype(jnp.float32), ((0, n_pad - N), (0, 0)))
    rel_t_p = jnp.pad(rel_t, ((0, e_pad - E), (0, 0)))
    msg_p = jnp.pad(msg.astype(jnp.float32), ((0, e_pad - E), (0, 0)))
    src_p = jnp.pad(src, (0, e_pad - E))[:, None]                     # padded src -> node 0
    dst_p = jnp.pad(dst, (0, e_pad - E), constant_values=n_pad)[:, None]  # out of every tile

    h, d1 = _conv_layer(x_p, rel_t_p, msg_p, src_p, dst_p,
                        params["conv1"], params["time"],
                        heads=heads, out_ch=C, concat=True,
                        tile_n=tile_n, tile_e=tile_e, compute_dtype=compute_dtype)
    h = h[:, :d1]                       # no-op when heads*out_channels is 128-aligned
    out, d2 = _conv_layer(h, rel_t_p, msg_p, src_p, dst_p,
                          params["conv2"], params["time"],
                          heads=1, out_ch=C, concat=False,
                          tile_n=tile_n, tile_e=tile_e, compute_dtype=compute_dtype)
    return out[:N, :d2]


# ----------------------------------------------------------------------------
# Deterministic parameter initialization (shapes from the PyTorch module)
# ----------------------------------------------------------------------------
def init_params(key, in_channels, out_channels, msg_dim, time_dim, heads=8):
    edge_dim = msg_dim + time_dim

    def lin(k, fi, fo, scale=0.1):
        kw, kb = jax.random.split(k)
        return (scale * jax.random.normal(kw, (fi, fo), jnp.float32),
                scale * jax.random.normal(kb, (1, fo), jnp.float32))

    keys = jax.random.split(key, 12)

    def conv_params(ks, fin, h, c):
        hc = h * c
        wq, bq = lin(ks[0], fin, hc)
        wk, bk = lin(ks[1], fin, hc)
        wv, bv = lin(ks[2], fin, hc)
        we, _ = lin(ks[3], edge_dim, hc)                 # lin_edge has no bias in PyG
        ws, bs = lin(ks[4], fin, hc if h > 1 else c)     # conv1 concat -> hc, conv2 -> c
        return dict(wq=wq, bq=bq, wk=wk, bk=bk, wv=wv, bv=bv, we=we, ws=ws, bs=bs)

    wt, bt = lin(keys[0], 1, time_dim)
    conv1 = conv_params(keys[1:6], in_channels, heads, out_channels)
    conv2 = conv_params(keys[6:11], out_channels * heads, 1, out_channels)
    return dict(time=dict(w=wt, b=bt), conv1=conv1, conv2=conv2,
                heads=heads, out_channels=out_channels)


# ----------------------------------------------------------------------------
# Pure-JAX reference (mirrors PyG TransformerConv semantics) for validation
# ----------------------------------------------------------------------------
def _ref_conv(x, edge_attr, src, dst, p, heads, out_ch, concat, N):
    H, C = heads, out_ch
    q = (x @ p["wq"] + p["bq"]).reshape(-1, H, C)
    k = (x @ p["wk"] + p["bk"]).reshape(-1, H, C)
    v = (x @ p["wv"] + p["bv"]).reshape(-1, H, C)
    e = (edge_attr @ p["we"]).reshape(-1, H, C)
    q_e = q[dst]
    k_e = k[src] + e
    v_e = v[src] + e
    alpha = (q_e * k_e).sum(-1) / math.sqrt(C)
    m = jnp.full((N, H), -jnp.inf, jnp.float32).at[dst].max(alpha)
    ex = jnp.exp(alpha - m[dst])
    den = jnp.zeros((N, H), jnp.float32).at[dst].add(ex)
    a = ex / (den[dst] + 1e-16)
    out = jnp.zeros((N, H, C), jnp.float32).at[dst].add(v_e * a[..., None])
    out = out.reshape(N, H * C) if concat else out.mean(axis=1)
    out = out + x @ p["ws"] + p["bs"]
    return jax.nn.relu(out)


def _ref_forward(x, last_update, edge_index, t, msg, params):
    N = x.shape[0]
    src, dst = edge_index[0], edge_index[1]
    rel_t = (last_update[src] - t).astype(x.dtype)[:, None]
    rel_t_enc = jnp.cos(rel_t * params["time"]["w"] + params["time"]["b"])
    edge_attr = jnp.concatenate([rel_t_enc, msg], axis=-1)
    h = _ref_conv(x, edge_attr, src, dst, params["conv1"],
                  params["heads"], params["out_channels"], True, N)
    return _ref_conv(h, edge_attr, src, dst, params["conv2"],
                     1, params["out_channels"], False, N)


# ----------------------------------------------------------------------------
if __name__ == "__main__":
    N, E = 16, 32
    in_channels, out_channels, heads = 32, 16, 8
    msg_dim, time_dim = 16, 16

    key = jax.random.PRNGKey(0)
    k_par, k_x, k_lu, k_ei, k_t, k_msg = jax.random.split(key, 6)

    params = init_params(k_par, in_channels, out_channels, msg_dim, time_dim, heads)

    x = jax.random.normal(k_x, (N, in_channels), jnp.float32)
    last_update = jax.random.uniform(k_lu, (N,), jnp.float32, 0.0, 10.0)
    edge_index = jax.random.randint(k_ei, (2, E), 0, N, dtype=jnp.int32)
    t = jax.random.uniform(k_t, (E,), jnp.float32, 0.0, 10.0)
    msg = jax.random.normal(k_msg, (E, msg_dim), jnp.float32)

    out = graph_attention_embedding(x, last_update, edge_index, t, msg, params)
    out = jax.block_until_ready(out)
    assert out.shape == (N, out_channels) and out.dtype == jnp.float32

    ref = _ref_forward(x, last_update, edge_index, t, msg, params)
    err = float(jnp.max(jnp.abs(out - ref)))
    assert err < 1e-2, f"mismatch vs plain-JAX reference: max abs err = {err}"

    print("KERNEL_OK")
</pallas_src>

<mosaic_0001>
module attributes {stable_mosaic.version = 11 : i64} {
  func.func @_proj_kernel(%arg0: i32, %arg1: memref<16x32xf32, #tpu.memory_space<vmem>>, %arg2: memref<32x128xf32, #tpu.memory_space<vmem>>, %arg3: memref<1x128xf32, #tpu.memory_space<vmem>>, %arg4: memref<32x128xf32, #tpu.memory_space<vmem>>, %arg5: memref<1x128xf32, #tpu.memory_space<vmem>>, %arg6: memref<32x128xf32, #tpu.memory_space<vmem>>, %arg7: memref<1x128xf32, #tpu.memory_space<vmem>>, %arg8: memref<32x128xf32, #tpu.memory_space<vmem>>, %arg9: memref<1x128xf32, #tpu.memory_space<vmem>>, %arg10: memref<16x128xf32, #tpu.memory_space<vmem>>, %arg11: memref<16x128xf32, #tpu.memory_space<vmem>>, %arg12: memref<16x128xf32, #tpu.memory_space<vmem>>, %arg13: memref<16x128xf32, #tpu.memory_space<vmem>>) attributes {dimension_semantics = [#tpu.dimension_semantics<parallel>], iteration_bounds = array<i64: 1>, scalar_prefetch = 0 : i64, scratch_operands = 0 : i64, tpu.core_type = #tpu.core_type<tc>, window_params = [{transform_indices = @transform_0, window_bounds = array<i64: 16, 32>}, {pipeline_mode = #tpu.pipeline_mode<synchronous>, transform_indices = @transform_1, window_bounds = array<i64: 32, 128>}, {pipeline_mode = #tpu.pipeline_mode<synchronous>, transform_indices = @transform_2, window_bounds = array<i64: 1, 128>}, {pipeline_mode = #tpu.pipeline_mode<synchronous>, transform_indices = @transform_3, window_bounds = array<i64: 32, 128>}, {pipeline_mode = #tpu.pipeline_mode<synchronous>, transform_indices = @transform_4, window_bounds = array<i64: 1, 128>}, {pipeline_mode = #tpu.pipeline_mode<synchronous>, transform_indices = @transform_5, window_bounds = array<i64: 32, 128>}, {pipeline_mode = #tpu.pipeline_mode<synchronous>, transform_indices = @transform_6, window_bounds = array<i64: 1, 128>}, {pipeline_mode = #tpu.pipeline_mode<synchronous>, transform_indices = @transform_7, window_bounds = array<i64: 32, 128>}, {pipeline_mode = #tpu.pipeline_mode<synchronous>, transform_indices = @transform_8, window_bounds = array<i64: 1, 128>}, {transform_indices = @transform_9, window_bounds = array<i64: 16, 128>}, {transform_indices = @transform_10, window_bounds = array<i64: 16, 128>}, {transform_indices = @transform_11, window_bounds = array<i64: 16, 128>}, {transform_indices = @transform_12, window_bounds = array<i64: 16, 128>}]} {
    %c0 = arith.constant 0 : index
    %c0_0 = arith.constant 0 : index
    %0 = vector.load %arg1[%c0, %c0_0] : memref<16x32xf32, #tpu.memory_space<vmem>>, vector<16x32xf32>
    %c0_1 = arith.constant 0 : index
    %c0_2 = arith.constant 0 : index
    %1 = vector.load %arg2[%c0_1, %c0_2] : memref<32x128xf32, #tpu.memory_space<vmem>>, vector<32x128xf32>
    %cst = arith.constant dense<0.000000e+00> : vector<16x128xf32>
    %2 = tpu.matmul %0, %1, %cst {dimension_numbers = #tpu.dot_dimension_numbers<[1], [0], [0], [1], [0, 0, 1, 1], [], []>} : vector<16x32xf32>, vector<32x128xf32>, vector<16x128xf32> -> vector<16x128xf32>
    %c0_3 = arith.constant 0 : index
    %c0_4 = arith.constant 0 : index
    %3 = vector.load %arg3[%c0_3, %c0_4] : memref<1x128xf32, #tpu.memory_space<vmem>>, vector<1x128xf32>
    %4 = vector.broadcast %3 : vector<1x128xf32> to vector<16x128xf32>
    %5 = arith.addf %2, %4 : vector<16x128xf32>
    %c0_5 = arith.constant 0 : index
    %c0_6 = arith.constant 0 : index
    %6 = vector.load %arg10[%c0_5, %c0_6] : memref<16x128xf32, #tpu.memory_space<vmem>>, vector<16x128xf32>
    tpu.vector_store %arg10[%c0_5, %c0_6], %5 {strides = array<i32>} : memref<16x128xf32, #tpu.memory_space<vmem>>, vector<16x128xf32>,
    %c0_7 = arith.constant 0 : index
    %c0_8 = arith.constant 0 : index
    %7 = vector.load %arg4[%c0_7, %c0_8] : memref<32x128xf32, #tpu.memory_space<vmem>>, vector<32x128xf32>
    %cst_9 = arith.constant dense<0.000000e+00> : vector<16x128xf32>
    %8 = tpu.matmul %0, %7, %cst_9 {dimension_numbers = #tpu.dot_dimension_numbers<[1], [0], [0], [1], [0, 0, 1, 1], [], []>} : vector<16x32xf32>, vector<32x128xf32>, vector<16x128xf32> -> vector<16x128xf32>
    %c0_10 = arith.constant 0 : index
    %c0_11 = arith.constant 0 : index
    %9 = vector.load %arg5[%c0_10, %c0_11] : memref<1x128xf32, #tpu.memory_space<vmem>>, vector<1x128xf32>
    %10 = vector.broadcast %9 : vector<1x128xf32> to vector<16x128xf32>
    %11 = arith.addf %8, %10 : vector<16x128xf32>
    %c0_12 = arith.constant 0 : index
    %c0_13 = arith.constant 0 : index
    %12 = vector.load %arg11[%c0_12, %c0_13] : memref<16x128xf32, #tpu.memory_space<vmem>>, vector<16x128xf32>
    tpu.vector_store %arg11[%c0_12, %c0_13], %11 {strides = array<i32>} : memref<16x128xf32, #tpu.memory_space<vmem>>, vector<16x128xf32>,
    %c0_14 = arith.constant 0 : index
    %c0_15 = arith.constant 0 : index
    %13 = vector.load %arg6[%c0_14, %c0_15] : memref<32x128xf32, #tpu.memory_space<vmem>>, vector<32x128xf32>
    %cst_16 = arith.constant dense<0.000000e+00> : vector<16x128xf32>
    %14 = tpu.matmul %0, %13, %cst_16 {dimension_numbers = #tpu.dot_dimension_numbers<[1], [0], [0], [1], [0, 0, 1, 1], [], []>} : vector<16x32xf32>, vector<32x128xf32>, vector<16x128xf32> -> vector<16x128xf32>
    %c0_17 = arith.constant 0 : index
    %c0_18 = arith.constant 0 : index
    %15 = vector.load %arg7[%c0_17, %c0_18] : memref<1x128xf32, #tpu.memory_space<vmem>>, vector<1x128xf32>
    %16 = vector.broadcast %15 : vector<1x128xf32> to vector<16x128xf32>
    %17 = arith.addf %14, %16 : vector<16x128xf32>
    %c0_19 = arith.constant 0 : index
    %c0_20 = arith.constant 0 : index
    %18 = vector.load %arg12[%c0_19, %c0_20] : memref<16x128xf32, #tpu.memory_space<vmem>>, vector<16x128xf32>
    tpu.vector_store %arg12[%c0_19, %c0_20], %17 {strides = array<i32>} : memref<16x128xf32, #tpu.memory_space<vmem>>, vector<16x128xf32>,
    %c0_21 = arith.constant 0 : index
    %c0_22 = arith.constant 0 : index
    %19 = vector.load %arg8[%c0_21, %c0_22] : memref<32x128xf32, #tpu.memory_space<vmem>>, vector<32x128xf32>
    %cst_23 = arith.constant dense<0.000000e+00> : vector<16x128xf32>
    %20 = tpu.matmul %0, %19, %cst_23 {dimension_numbers = #tpu.dot_dimension_numbers<[1], [0], [0], [1], [0, 0, 1, 1], [], []>} : vector<16x32xf32>, vector<32x128xf32>, vector<16x128xf32> -> vector<16x128xf32>
    %c0_24 = arith.constant 0 : index
    %c0_25 = arith.constant 0 : index
    %21 = vector.load %arg9[%c0_24, %c0_25] : memref<1x128xf32, #tpu.memory_space<vmem>>, vector<1x128xf32>
    %22 = vector.broadcast %21 : vector<1x128xf32> to vector<16x128xf32>
    %23 = arith.addf %20, %22 : vector<16x128xf32>
    %c0_26 = arith.constant 0 : index
    %c0_27 = arith.constant 0 : index
    %24 = vector.load %arg13[%c0_26, %c0_27] : memref<16x128xf32, #tpu.memory_space<vmem>>, vector<16x128xf32>
    tpu.vector_store %arg13[%c0_26, %c0_27], %23 {strides = array<i32>} : memref<16x128xf32, #tpu.memory_space<vmem>>, vector<16x128xf32>,
    return
  }
  func.func @transform_0(%arg0: i32) -> (i32, i32) {
    %c0_i32 = arith.constant 0 : i32
    %c0_i32_0 = arith.constant 0 : i32
    return %arg0, %c0_i32 : i32, i32
  }
  func.func @transform_1(%arg0: i32) -> (i32, i32) {
    %c0_i32 = arith.constant 0 : i32
    %c0_i32_0 = arith.constant 0 : i32
    %c0_i32_1 = arith.constant 0 : i32
    return %c0_i32, %c0_i32_0 : i32, i32
  }
  func.func @transform_2(%arg0: i32) -> (i32, i32) {
    %c0_i32 = arith.constant 0 : i32
    %c0_i32_0 = arith.constant 0 : i32
    %c0_i32_1 = arith.constant 0 : i32
    return %c0_i32, %c0_i32_0 : i32, i32
  }
  func.func @transform_3(%arg0: i32) -> (i32, i32) {
    %c0_i32 = arith.constant 0 : i32
    %c0_i32_0 = arith.constant 0 : i32
    %c0_i32_1 = arith.constant 0 : i32
    return %c0_i32, %c0_i32_0 : i32, i32
  }
  func.func @transform_4(%arg0: i32) -> (i32, i32) {
    %c0_i32 = arith.constant 0 : i32
    %c0_i32_0 = arith.constant 0 : i32
    %c0_i32_1 = arith.constant 0 : i32
    return %c0_i32, %c0_i32_0 : i32, i32
  }
  func.func @transform_5(%arg0: i32) -> (i32, i32) {
    %c0_i32 = arith.constant 0 : i32
    %c0_i32_0 = arith.constant 0 : i32
    %c0_i32_1 = arith.constant 0 : i32
    return %c0_i32, %c0_i32_0 : i32, i32
  }
  func.func @transform_6(%arg0: i32) -> (i32, i32) {
    %c0_i32 = arith.constant 0 : i32
    %c0_i32_0 = arith.constant 0 : i32
    %c0_i32_1 = arith.constant 0 : i32
    return %c0_i32, %c0_i32_0 : i32, i32
  }
  func.func @transform_7(%arg0: i32) -> (i32, i32) {
    %c0_i32 = arith.constant 0 : i32
    %c0_i32_0 = arith.constant 0 : i32
    %c0_i32_1 = arith.constant 0 : i32
    return %c0_i32, %c0_i32_0 : i32, i32
  }
  func.func @transform_8(%arg0: i32) -> (i32, i32) {
    %c0_i32 = arith.constant 0 : i32
    %c0_i32_0 = arith.constant 0 : i32
    %c0_i32_1 = arith.constant 0 : i32
    return %c0_i32, %c0_i32_0 : i32, i32
  }
  func.func @transform_9(%arg0: i32) -> (i32, i32) {
    %c0_i32 = arith.constant 0 : i32
    %c0_i32_0 = arith.constant 0 : i32
    return %arg0, %c0_i32 : i32, i32
  }
  func.func @transform_10(%arg0: i32) -> (i32, i32) {
    %c0_i32 = arith.constant 0 : i32
    %c0_i32_0 = arith.constant 0 : i32
    return %arg0, %c0_i32 : i32, i32
  }
  func.func @transform_11(%arg0: i32) -> (i32, i32) {
    %c0_i32 = arith.constant 0 : i32
    %c0_i32_0 = arith.constant 0 : i32
    return %arg0, %c0_i32 : i32, i32
  }
  func.func @transform_12(%arg0: i32) -> (i32, i32) {
    %c0_i32 = arith.constant 0 : i32
    %c0_i32_0 = arith.constant 0 : i32
    return %arg0, %c0_i32 : i32, i32
  }
}

</mosaic_0001>

<llo_original>
// kernel: tpu_custom_call.1
$region0: #{tpu_custom_call.1}
  #allocation0 [shape = 'u32[]', space=smem, size = 0x4, offset = 0x4, fixed_abs, tag = 'smem constant byte address 0x4 - core index']
  #allocation1 [shape = 'u32[144,128]{1,0:T(1,128)}', space=vmem, size = 0x12000, scoped, tag = 'internal scratch']
  %s0 = inlined_call_operand.hbm [shape: f32[16,32], index: 0, kind: input, shape index: {}]
  %s1 = inlined_call_operand.hbm [shape: f32[32,128], index: 1, kind: input, shape index: {}]
  %s2 = inlined_call_operand.vmem [shape: f32[1,128], index: 2, kind: input, shape index: {}]
  %s3 = inlined_call_operand.hbm [shape: f32[32,128], index: 3, kind: input, shape index: {}]
  %s4 = inlined_call_operand.vmem [shape: f32[1,128], index: 4, kind: input, shape index: {}]
  %s5 = inlined_call_operand.hbm [shape: f32[32,128], index: 5, kind: input, shape index: {}]
  %s6 = inlined_call_operand.vmem [shape: f32[1,128], index: 6, kind: input, shape index: {}]
  %s7 = inlined_call_operand.hbm [shape: f32[32,128], index: 7, kind: input, shape index: {}]
  %s8 = inlined_call_operand.vmem [shape: f32[1,128], index: 8, kind: input, shape index: {}]
  %s9 = inlined_call_operand.hbm [shape: f32[16,128], index: 9, kind: output, shape index: {0}]
  %s10 = inlined_call_operand.hbm [shape: f32[16,128], index: 10, kind: output, shape index: {1}]
  %s11 = inlined_call_operand.hbm [shape: f32[16,128], index: 11, kind: output, shape index: {2}]
  %s12 = inlined_call_operand.hbm [shape: f32[16,128], index: 12, kind: output, shape index: {3}]
  %13 = xla_tuple %s9, %s10, %s11, %s12
  %s14 = sld [smem:[#allocation0]]
  $region90: #{tpu_custom_call.1} parent=0
    _
  %s16 = ssub.s32 1, %s14
  %s17 = scalar_select 0, %s16, %s14
  $region1: #{tpu_custom_call.1} parent=0
    #allocation2 [shape = 'u8[8192]{0}', space=vmem, size = 0x2000, scoped, tag = 'input window, operand 0, single buffered']
    #allocation3 [shape = 's32[1]{0}', space=sflag, size = 0x4, scoped, tag = 'scoped memory for tpu_custom_call.1']
    #allocation4 [shape = 's32[1]{0}', space=sflag, size = 0x4, scoped, tag = 'scoped memory for tpu_custom_call.1']
    #allocation5 [shape = 'u8[16384]{0}', space=vmem, size = 0x4000, scoped, tag = 'input window, operand 1, single buffered']
    #allocation6 [shape = 's32[1]{0}', space=sflag, size = 0x4, scoped, tag = 'scoped memory for tpu_custom_call.1']
    #allocation7 [shape = 'u8[16384]{0}', space=vmem, size = 0x4000, scoped, tag = 'input window, operand 3, single buffered']
    #allocation8 [shape = 'u8[16384]{0}', space=vmem, size = 0x4000, scoped, tag = 'input window, operand 5, single buffered']
    #allocation9 [shape = 's32[1]{0}', space=sflag, size = 0x4, scoped, tag = 'scoped memory for tpu_custom_call.1']
    #allocation10 [shape = 'u8[16384]{0}', space=vmem, size = 0x4000, scoped, tag = 'input window, operand 7, single buffered']
    #allocation11 [shape = 'u8[8192]{0}', space=vmem, size = 0x2000, scoped, tag = 'output window, operand 0, single buffered']
    #allocation12 [shape = 'u8[8192]{0}', space=vmem, size = 0x2000, scoped, tag = 'output window, operand 1, single buffered']
    #allocation13 [shape = 's32[1]{0}', space=sflag, size = 0x4, scoped, tag = 'scoped memory for tpu_custom_call.1']
    #allocation14 [shape = 'u8[8192]{0}', space=vmem, size = 0x2000, scoped, tag = 'output window, operand 2, single buffered']
    #allocation15 [shape = 'u8[8192]{0}', space=vmem, size = 0x2000, scoped, tag = 'output window, operand 3, single buffered']
    #allocation16 [shape = 's32[1]{0}', space=sflag, size = 0x4, scoped, tag = 'scoped memory for tpu_custom_call.1']
    %18 = vsyncpa [#allocation3], 0
    %19 = vsyncpa [#allocation6], 0
    %20 = vsyncpa [#allocation9], 0
    %21 = vsyncpa [#allocation4], 0
    %22 = vsyncpa [#allocation13], 0
    %23 = vsyncpa [#allocation16], 0
    // Predicated region
    $region2: #{tpu_custom_call.1} parent=1 // pred_check
      _
    $region3: #{tpu_custom_call.1} parent=1 // pred_check_branch
      %25 = sbr.rel (0) target = $region5
    $region4: #{tpu_custom_call.1} parent=1 // pred_region
      %s27 = ssub.s32 256, 256
      %28 = vsyncadd [#allocation3], %s27
      %s29 = sshll.u32 [#allocation2], 4
      %s30 = int_to_ptr.vmem [resolvable:$true] %s29
      %35 = dma.hbm_to_vmem [thread:$0]  %s0, 256, %s30, [#allocation3], 128, 128, 8
    $region5: #{tpu_custom_call.1} parent=1 // pred_fallthru
      _
    // Predicated region
    $region6: #{tpu_custom_call.1} parent=1 // pred_check
      _
    $region7: #{tpu_custom_call.1} parent=1 // pred_check_branch
      %37 = sbr.rel (0) target = $region9
    $region8: #{tpu_custom_call.1} parent=1 // pred_region
      %s39 = ssub.s32 512, 512
      %40 = vsyncadd [#allocation6], %s39
      %s41 = sshll.u32 [#allocation5], 4
      %s42 = int_to_ptr.vmem [resolvable:$true] %s41
      %47 = dma.hbm_to_vmem [thread:$0]  %s1, 512, %s42, [#allocation6], 128, 128, 8
    $region9: #{tpu_custom_call.1} parent=1 // pred_fallthru
      _
    // Predicated region
    $region10: #{tpu_custom_call.1} parent=1 // pred_check
      _
    $region11: #{tpu_custom_call.1} parent=1 // pred_check_branch
      %49 = sbr.rel (0) target = $region13
    $region12: #{tpu_custom_call.1} parent=1 // pred_region
      _
    $region13: #{tpu_custom_call.1} parent=1 // pred_fallthru
      _
    // Predicated region
    $region14: #{tpu_custom_call.1} parent=1 // pred_check
      _
    $region15: #{tpu_custom_call.1} parent=1 // pred_check_branch
      %51 = sbr.rel (0) target = $region17
    $region16: #{tpu_custom_call.1} parent=1 // pred_region
      %s53 = ssub.s32 512, 512
      %54 = vsyncadd [#allocation6], %s53
      %s55 = sshll.u32 [#allocation7], 4
      %s56 = int_to_ptr.vmem [resolvable:$true] %s55
      %61 = dma.hbm_to_vmem [thread:$0]  %s3, 512, %s56, [#allocation6], 128, 128, 8
    $region17: #{tpu_custom_call.1} parent=1 // pred_fallthru
      _
    // Predicated region
    $region18: #{tpu_custom_call.1} parent=1 // pred_check
      _
    $region19: #{tpu_custom_call.1} parent=1 // pred_check_branch
      %63 = sbr.rel (0) target = $region21
    $region20: #{tpu_custom_call.1} parent=1 // pred_region
      _
    $region21: #{tpu_custom_call.1} parent=1 // pred_fallthru
      _
    // Predicated region
    $region22: #{tpu_custom_call.1} parent=1 // pred_check
      _
    $region23: #{tpu_custom_call.1} parent=1 // pred_check_branch
      %65 = sbr.rel (0) target = $region25
    $region24: #{tpu_custom_call.1} parent=1 // pred_region
      %s67 = ssub.s32 512, 512
      %68 = vsyncadd [#allocation9], %s67
      %s69 = sshll.u32 [#allocation8], 4
      %s70 = int_to_ptr.vmem [resolvable:$true] %s69
      %75 = dma.hbm_to_vmem [thread:$0]  %s5, 512, %s70, [#allocation9], 128, 128, 8
    $region25: #{tpu_custom_call.1} parent=1 // pred_fallthru
      _
    // Predicated region
    $region26: #{tpu_custom_call.1} parent=1 // pred_check
      _
    $region27: #{tpu_custom_call.1} parent=1 // pred_check_branch
      %77 = sbr.rel (0) target = $region29
    $region28: #{tpu_custom_call.1} parent=1 // pred_region
      _
    $region29: #{tpu_custom_call.1} parent=1 // pred_fallthru
      _
    // Predicated region
    $region30: #{tpu_custom_call.1} parent=1 // pred_check
      _
    $region31: #{tpu_custom_call.1} parent=1 // pred_check_branch
      %79 = sbr.rel (0) target = $region33
    $region32: #{tpu_custom_call.1} parent=1 // pred_region
      %s81 = ssub.s32 512, 512
      %82 = vsyncadd [#allocation9], %s81
      %s83 = sshll.u32 [#allocation10], 4
      %s84 = int_to_ptr.vmem [resolvable:$true] %s83
      %89 = dma.hbm_to_vmem [thread:$0]  %s7, 512, %s84, [#allocation9], 128, 128, 8
    $region33: #{tpu_custom_call.1} parent=1 // pred_fallthru
      _
    // Predicated region
    $region34: #{tpu_custom_call.1} parent=1 // pred_check
      _
    $region35: #{tpu_custom_call.1} parent=1 // pred_check_branch
      %91 = sbr.rel (0) target = $region37
    $region36: #{tpu_custom_call.1} parent=1 // pred_region
      _
    $region37: #{tpu_custom_call.1} parent=1 // pred_fallthru
      _
    // Predicated region
    $region38: #{tpu_custom_call.1} parent=1 // pred_check
      _
    $region39: #{tpu_custom_call.1} parent=1 // pred_check_branch
      %93 = sbr.rel (0) target = $region41
    $region40: #{tpu_custom_call.1} parent=1 // pred_region
      %94 = dma.done [#allocation3], 256
    $region41: #{tpu_custom_call.1} parent=1 // pred_fallthru
      _
    // Predicated region
    $region42: #{tpu_custom_call.1} parent=1 // pred_check
      _
    $region43: #{tpu_custom_call.1} parent=1 // pred_check_branch
      %96 = sbr.rel (0) target = $region45
    $region44: #{tpu_custom_call.1} parent=1 // pred_region
      %97 = dma.done [#allocation6], 512
    $region45: #{tpu_custom_call.1} parent=1 // pred_fallthru
      _
    // Predicated region
    $region46: #{tpu_custom_call.1} parent=1 // pred_check
      _
    $region47: #{tpu_custom_call.1} parent=1 // pred_check_branch
      %99 = sbr.rel (0) target = $region49
    $region48: #{tpu_custom_call.1} parent=1 // pred_region
      %100 = dma.done [#allocation6], 512
    $region49: #{tpu_custom_call.1} parent=1 // pred_fallthru
      _
    // Predicated region
    $region50: #{tpu_custom_call.1} parent=1 // pred_check
      _
    $region51: #{tpu_custom_call.1} parent=1 // pred_check_branch
      %102 = sbr.rel (0) target = $region53
    $region52: #{tpu_custom_call.1} parent=1 // pred_region
      %103 = dma.done [#allocation9], 512
    $region53: #{tpu_custom_call.1} parent=1 // pred_fallthru
      _
    // Predicated region
    $region54: #{tpu_custom_call.1} parent=1 // pred_check
      _
    $region55: #{tpu_custom_call.1} parent=1 // pred_check_branch
      %105 = sbr.rel (0) target = $region57
    $region56: #{tpu_custom_call.1} parent=1 // pred_region
      %106 = dma.done [#allocation9], 512
    $region57: #{tpu_custom_call.1} parent=1 // pred_fallthru
      _
    %v107 = vld [vmem:[#allocation2] sm:$0xff]
    %v108 = vld [vmem:[#allocation2 + $0x8] sm:$0xff]
    %v109 = vld [vmem:[#allocation5] sm:$0xff]
    %v110 = vld [vmem:[#allocation5 + $0x8] sm:$0xff]
    %v111 = vld [vmem:[#allocation5 + $0x10] sm:$0xff]
    %v112 = vld [vmem:[#allocation5 + $0x18] sm:$0xff]
    %v113 = vld [vmem:[%s2] sm:$0x1]
    %v115 = vlaneseq
    %v116 = vshrl.u32 %v115, 7
    %v117 = vsub.s32 0, %v116
    %v118 = vrot.slane %v113, %v117
    %vm120 = vcmask 261120
    %v122 = vsel %vm120, %v107, 0
    %v125 = vsel %vm120, %v108, 0
    %127 = vmatprep.subr.mxu0 0.0
    %128 = vmatpush1.msra.mxu0 0.0
    %129 = vmatprep.subr.mxu0 0.0
    %130 = vmatpush1.msra.mxu0 0.0
    %131 = vmatprep.subr.mxu0 0.0
    %132 = vmatpush1.msra.mxu0 0.0
    %133 = vmatprep.subr.mxu0 0.0
    %134 = vmatpush1.msra.mxu0 0.0
    %135 = vmatprep.subr.mxu0 0.0
    %136 = vmatpush1.msra.mxu0 0.0
    %137 = vmatprep.subr.mxu0 0.0
    %138 = vmatpush1.msra.mxu0 0.0
    %139 = vmatprep.subr.mxu0 0.0
    %140 = vmatpush1.msra.mxu0 0.0
    %141 = vmatprep.subr.mxu0 0.0
    %142 = vmatpush1.msra.mxu0 0.0
    %143 = vmatprep.subr.mxu0 0.0
    %144 = vmatpush1.msra.mxu0 0.0
    %145 = vmatprep.subr.mxu0 0.0
    %146 = vmatpush1.msra.mxu0 0.0
    %147 = vmatprep.subr.mxu0 0.0
    %148 = vmatpush1.msra.mxu0 0.0
    %149 = vmatprep.subr.mxu0 0.0
    %150 = vmatpush1.msra.mxu0 0.0
    %151 = vmatprep.subr.mxu0 0.0
    %152 = vmatpush1.msra.mxu0 %v112
    %153 = vmatprep.subr.mxu0 0.0
    %154 = vmatpush1.msra.mxu0 %v111
    %155 = vmatprep.subr.mxu0 0.0
    %156 = vmatpush1.msra.mxu0 %v110
    %157 = vmatprep.subr.mxu0 0.0
    %158 = vmatpush1.msra.mxu0 %v109
    %159 = vmatprep.subr.mxu0 0.0
    %160 = vmatpush2.msra.mxu0 0.0
    %161 = vmatprep.subr.mxu0 0.0
    %162 = vmatpush2.msra.mxu0 0.0
    %163 = vmatprep.subr.mxu0 0.0
    %164 = vmatpush2.msra.mxu0 0.0
    %165 = vmatprep.subr.mxu0 0.0
    %166 = vmatpush2.msra.mxu0 0.0
    %167 = vmatprep.subr.mxu0 0.0
    %168 = vmatpush2.msra.mxu0 0.0
    %169 = vmatprep.subr.mxu0 0.0
    %170 = vmatpush2.msra.mxu0 0.0
    %171 = vmatprep.subr.mxu0 0.0
    %172 = vmatpush2.msra.mxu0 0.0
    %173 = vmatprep.subr.mxu0 0.0
    %174 = vmatpush2.msra.mxu0 0.0
    %175 = vmatprep.subr.mxu0 0.0
    %176 = vmatpush2.msra.mxu0 0.0
    %177 = vmatprep.subr.mxu0 0.0
    %178 = vmatpush2.msra.mxu0 0.0
    %179 = vmatprep.subr.mxu0 0.0
    %180 = vmatpush2.msra.mxu0 0.0
    %181 = vmatprep.subr.mxu0 0.0
    %182 = vmatpush2.msra.mxu0 0.0
    %183 = vmatprep.subr.mxu0 0.0
    %184 = vmatpush2.msra.mxu0 0.0
    %185 = vmatprep.subr.mxu0 0.0
    %186 = vmatpush2.msra.mxu0 0.0
    %187 = vmatprep.subr.mxu0 0.0
    %188 = vmatpush2.msra.mxu0 0.0
    %189 = vmatprep.subr.mxu0 0.0
    %190 = vmatpush2.msra.mxu0 0.0
    %191 = vmatprep.mubr.f32.mxu0 0.0
    %192 = vmatmul.mubr.f32.gmra.mxu0 %v122
    %v193 = vpop.f32.mrf.mxu0
    %v194 = vadd.f32 %v118, %v193
    %v195 = vpop.f32.mrf.mxu0
    %196 = vmatprep.mubr.f32.mxu0 0.0
    %197 = vmatmul.mubr.f32.gmra.mxu0 %v125
    %v198 = vpop.f32.mrf.mxu0
    %v199 = vadd.f32 %v118, %v198
    %v200 = vpop.f32.mrf.mxu0
    %201 = vdwg.mxu0
    %202 = vst [vmem:[#allocation11] sm:$0xff] %v194
    %203 = vst [vmem:[#allocation11 + $0x8] sm:$0xff] %v199
    %v204 = vld [vmem:[#allocation7] sm:$0xff]
    %v205 = vld [vmem:[#allocation7 + $0x8] sm:$0xff]
    %v206 = vld [vmem:[#allocation7 + $0x10] sm:$0xff]
    %v207 = vld [vmem:[#allocation7 + $0x18] sm:$0xff]
    %v208 = vld [vmem:[%s4] sm:$0x1]
    %v210 = vlaneseq
    %v211 = vshrl.u32 %v210, 7
    %v212 = vsub.s32 0, %v211
    %v213 = vrot.slane %v208, %v212
    %215 = vmatprep.subr.mxu0 0.0
    %216 = vmatpush1.msra.mxu0 0.0
    %217 = vmatprep.subr.mxu0 0.0
    %218 = vmatpush1.msra.mxu0 0.0
    %219 = vmatprep.subr.mxu0 0.0
    %220 = vmatpush1.msra.mxu0 0.0
    %221 = vmatprep.subr.mxu0 0.0
    %222 = vmatpush1.msra.mxu0 0.0
    %223 = vmatprep.subr.mxu0 0.0
    %224 = vmatpush1.msra.mxu0 0.0
    %225 = vmatprep.subr.mxu0 0.0
    %226 = vmatpush1.msra.mxu0 0.0
    %227 = vmatprep.subr.mxu0 0.0
    %228 = vmatpush1.msra.mxu0 0.0
    %229 = vmatprep.subr.mxu0 0.0
    %230 = vmatpush1.msra.mxu0 0.0
    %231 = vmatprep.subr.mxu0 0.0
    %232 = vmatpush1.msra.mxu0 0.0
    %233 = vmatprep.subr.mxu0 0.0
    %234 = vmatpush1.msra.mxu0 0.0
    %235 = vmatprep.subr.mxu0 0.0
    %236 = vmatpush1.msra.mxu0 0.0
    %237 = vmatprep.subr.mxu0 0.0
    %238 = vmatpush1.msra.mxu0 0.0
    %239 = vmatprep.subr.mxu0 0.0
    %240 = vmatpush1.msra.mxu0 %v207
    %241 = vmatprep.subr.mxu0 0.0
    %242 = vmatpush1.msra.mxu0 %v206
    %243 = vmatprep.subr.mxu0 0.0
    %244 = vmatpush1.msra.mxu0 %v205
    %245 = vmatprep.subr.mxu0 0.0
    %246 = vmatpush1.msra.mxu0 %v204
    %247 = vmatprep.subr.mxu0 0.0
    %248 = vmatpush2.msra.mxu0 0.0
    %249 = vmatprep.subr.mxu0 0.0
    %250 = vmatpush2.msra.mxu0 0.0
    %251 = vmatprep.subr.mxu0 0.0
    %252 = vmatpush2.msra.mxu0 0.0
    %253 = vmatprep.subr.mxu0 0.0
    %254 = vmatpush2.msra.mxu0 0.0
    %255 = vmatprep.subr.mxu0 0.0
    %256 = vmatpush2.msra.mxu0 0.0
    %257 = vmatprep.subr.mxu0 0.0
    %258 = vmatpush2.msra.mxu0 0.0
    %259 = vmatprep.subr.mxu0 0.0
    %260 = vmatpush2.msra.mxu0 0.0
    %261 = vmatprep.subr.mxu0 0.0
    %262 = vmatpush2.msra.mxu0 0.0
    %263 = vmatprep.subr.mxu0 0.0
    %264 = vmatpush2.msra.mxu0 0.0
    %265 = vmatprep.subr.mxu0 0.0
    %266 = vmatpush2.msra.mxu0 0.0
    %267 = vmatprep.subr.mxu0 0.0
    %268 = vmatpush2.msra.mxu0 0.0
    %269 = vmatprep.subr.mxu0 0.0
    %270 = vmatpush2.msra.mxu0 0.0
    %271 = vmatprep.subr.mxu0 0.0
    %272 = vmatpush2.msra.mxu0 0.0
    %273 = vmatprep.subr.mxu0 0.0
    %274 = vmatpush2.msra.mxu0 0.0
    %275 = vmatprep.subr.mxu0 0.0
    %276 = vmatpush2.msra.mxu0 0.0
    %277 = vmatprep.subr.mxu0 0.0
    %278 = vmatpush2.msra.mxu0 0.0
    %279 = vmatprep.mubr.f32.mxu0 0.0
    %280 = vmatmul.mubr.f32.gmra.mxu0 %v122
    %v281 = vpop.f32.mrf.mxu0
    %v282 = vadd.f32 %v213, %v281
    %v283 = vpop.f32.mrf.mxu0
    %284 = vmatprep.mubr.f32.mxu0 0.0
    %285 = vmatmul.mubr.f32.gmra.mxu0 %v125
    %v286 = vpop.f32.mrf.mxu0
    %v287 = vadd.f32 %v213, %v286
    %v288 = vpop.f32.mrf.mxu0
    %289 = vdwg.mxu0
    %290 = vst [vmem:[#allocation12] sm:$0xff] %v282
    %291 = vst [vmem:[#allocation12 + $0x8] sm:$0xff] %v287
    %v292 = vld [vmem:[#allocation8] sm:$0xff]
    %v293 = vld [vmem:[#allocation8 + $0x8] sm:$0xff]
    %v294 = vld [vmem:[#allocation8 + $0x10] sm:$0xff]
    %v295 = vld [vmem:[#allocation8 + $0x18] sm:$0xff]
    %v296 = vld [vmem:[%s6] sm:$0x1]
    %v298 = vlaneseq
    %v299 = vshrl.u32 %v298, 7
    %v300 = vsub.s32 0, %v299
    %v301 = vrot.slane %v296, %v300
    %303 = vmatprep.subr.mxu0 0.0
    %304 = vmatpush1.msra.mxu0 0.0
    %305 = vmatprep.subr.mxu0 0.0
    %306 = vmatpush1.msra.mxu0 0.0
    %307 = vmatprep.subr.mxu0 0.0
    %308 = vmatpush1.msra.mxu0 0.0
    %309 = vmatprep.subr.mxu0 0.0
    %310 = vmatpush1.msra.mxu0 0.0
    %311 = vmatprep.subr.mxu0 0.0
    %312 = vmatpush1.msra.mxu0 0.0
    %313 = vmatprep.subr.mxu0 0.0
    %314 = vmatpush1.msra.mxu0 0.0
    %315 = vmatprep.subr.mxu0 0.0
    %316 = vmatpush1.msra.mxu0 0.0
    %317 = vmatprep.subr.mxu0 0.0
    %318 = vmatpush1.msra.mxu0 0.0
    %319 = vmatprep.subr.mxu0 0.0
    %320 = vmatpush1.msra.mxu0 0.0
    %321 = vmatprep.subr.mxu0 0.0
    %322 = vmatpush1.msra.mxu0 0.0
    %323 = vmatprep.subr.mxu0 0.0
    %324 = vmatpush1.msra.mxu0 0.0
    %325 = vmatprep.subr.mxu0 0.0
    %326 = vmatpush1.msra.mxu0 0.0
    %327 = vmatprep.subr.mxu0 0.0
    %328 = vmatpush1.msra.mxu0 %v295
    %329 = vmatprep.subr.mxu0 0.0
    %330 = vmatpush1.msra.mxu0 %v294
    %331 = vmatprep.subr.mxu0 0.0
    %332 = vmatpush1.msra.mxu0 %v293
    %333 = vmatprep.subr.mxu0 0.0
    %334 = vmatpush1.msra.mxu0 %v292
    %335 = vmatprep.subr.mxu0 0.0
    %336 = vmatpush2.msra.mxu0 0.0
    %337 = vmatprep.subr.mxu0 0.0
    %338 = vmatpush2.msra.mxu0 0.0
    %339 = vmatprep.subr.mxu0 0.0
    %340 = vmatpush2.msra.mxu0 0.0
    %341 = vmatprep.subr.mxu0 0.0
    %342 = vmatpush2.msra.mxu0 0.0
    %343 = vmatprep.subr.mxu0 0.0
    %344 = vmatpush2.msra.mxu0 0.0
    %345 = vmatprep.subr.mxu0 0.0
    %346 = vmatpush2.msra.mxu0 0.0
    %347 = vmatprep.subr.mxu0 0.0
    %348 = vmatpush2.msra.mxu0 0.0
    %349 = vmatprep.subr.mxu0 0.0
    %350 = vmatpush2.msra.mxu0 0.0
    %351 = vmatprep.subr.mxu0 0.0
    %352 = vmatpush2.msra.mxu0 0.0
    %353 = vmatprep.subr.mxu0 0.0
    %354 = vmatpush2.msra.mxu0 0.0
    %355 = vmatprep.subr.mxu0 0.0
    %356 = vmatpush2.msra.mxu0 0.0
    %357 = vmatprep.subr.mxu0 0.0
    %358 = vmatpush2.msra.mxu0 0.0
    %359 = vmatprep.subr.mxu0 0.0
    %360 = vmatpush2.msra.mxu0 0.0
    %361 = vmatprep.subr.mxu0 0.0
    %362 = vmatpush2.msra.mxu0 0.0
    %363 = vmatprep.subr.mxu0 0.0
    %364 = vmatpush2.msra.mxu0 0.0
    %365 = vmatprep.subr.mxu0 0.0
    %366 = vmatpush2.msra.mxu0 0.0
    %367 = vmatprep.mubr.f32.mxu0 0.0
    %368 = vmatmul.mubr.f32.gmra.mxu0 %v122
    %v369 = vpop.f32.mrf.mxu0
    %v370 = vadd.f32 %v301, %v369
    %v371 = vpop.f32.mrf.mxu0
    %372 = vmatprep.mubr.f32.mxu0 0.0
    %373 = vmatmul.mubr.f32.gmra.mxu0 %v125
    %v374 = vpop.f32.mrf.mxu0
    %v375 = vadd.f32 %v301, %v374
    %v376 = vpop.f32.mrf.mxu0
    %377 = vdwg.mxu0
    %378 = vst [vmem:[#allocation14] sm:$0xff] %v370
    %379 = vst [vmem:[#allocation14 + $0x8] sm:$0xff] %v375
    %v380 = vld [vmem:[#allocation10] sm:$0xff]
    %v381 = vld [vmem:[#allocation10 + $0x8] sm:$0xff]
    %v382 = vld [vmem:[#allocation10 + $0x10] sm:$0xff]
    %v383 = vld [vmem:[#allocation10 + $0x18] sm:$0xff]
    %v384 = vld [vmem:[%s8] sm:$0x1]
    %v386 = vlaneseq
    %v387 = vshrl.u32 %v386, 7
    %v388 = vsub.s32 0, %v387
    %v389 = vrot.slane %v384, %v388
    %391 = vmatprep.subr.mxu0 0.0
    %392 = vmatpush1.msra.mxu0 0.0
    %393 = vmatprep.subr.mxu0 0.0
    %394 = vmatpush1.msra.mxu0 0.0
    %395 = vmatprep.subr.mxu0 0.0
    %396 = vmatpush1.msra.mxu0 0.0
    %397 = vmatprep.subr.mxu0 0.0
    %398 = vmatpush1.msra.mxu0 0.0
    %399 = vmatprep.subr.mxu0 0.0
    %400 = vmatpush1.msra.mxu0 0.0
    %401 = vmatprep.subr.mxu0 0.0
    %402 = vmatpush1.msra.mxu0 0.0
    %403 = vmatprep.subr.mxu0 0.0
    %404 = vmatpush1.msra.mxu0 0.0
    %405 = vmatprep.subr.mxu0 0.0
    %406 = vmatpush1.msra.mxu0 0.0
    %407 = vmatprep.subr.mxu0 0.0
    %408 = vmatpush1.msra.mxu0 0.0
    %409 = vmatprep.subr.mxu0 0.0
    %410 = vmatpush1.msra.mxu0 0.0
    %411 = vmatprep.subr.mxu0 0.0
    %412 = vmatpush1.msra.mxu0 0.0
    %413 = vmatprep.subr.mxu0 0.0
    %414 = vmatpush1.msra.mxu0 0.0
    %415 = vmatprep.subr.mxu0 0.0
    %416 = vmatpush1.msra.mxu0 %v383
    %417 = vmatprep.subr.mxu0 0.0
    %418 = vmatpush1.msra.mxu0 %v382
    %419 = vmatprep.subr.mxu0 0.0
    %420 = vmatpush1.msra.mxu0 %v381
    %421 = vmatprep.subr.mxu0 0.0
    %422 = vmatpush1.msra.mxu0 %v380
    %423 = vmatprep.subr.mxu0 0.0
    %424 = vmatpush2.msra.mxu0 0.0
    %425 = vmatprep.subr.mxu0 0.0
    %426 = vmatpush2.msra.mxu0 0.0
    %427 = vmatprep.subr.mxu0 0.0
    %428 = vmatpush2.msra.mxu0 0.0
    %429 = vmatprep.subr.mxu0 0.0
    %430 = vmatpush2.msra.mxu0 0.0
    %431 = vmatprep.subr.mxu0 0.0
    %432 = vmatpush2.msra.mxu0 0.0
    %433 = vmatprep.subr.mxu0 0.0
    %434 = vmatpush2.msra.mxu0 0.0
    %435 = vmatprep.subr.mxu0 0.0
    %436 = vmatpush2.msra.mxu0 0.0
    %437 = vmatprep.subr.mxu0 0.0
    %438 = vmatpush2.msra.mxu0 0.0
    %439 = vmatprep.subr.mxu0 0.0
    %440 = vmatpush2.msra.mxu0 0.0
    %441 = vmatprep.subr.mxu0 0.0
    %442 = vmatpush2.msra.mxu0 0.0
    %443 = vmatprep.subr.mxu0 0.0
    %444 = vmatpush2.msra.mxu0 0.0
    %445 = vmatprep.subr.mxu0 0.0
    %446 = vmatpush2.msra.mxu0 0.0
    %447 = vmatprep.subr.mxu0 0.0
    %448 = vmatpush2.msra.mxu0 0.0
    %449 = vmatprep.subr.mxu0 0.0
    %450 = vmatpush2.msra.mxu0 0.0
    %451 = vmatprep.subr.mxu0 0.0
    %452 = vmatpush2.msra.mxu0 0.0
    %453 = vmatprep.subr.mxu0 0.0
    %454 = vmatpush2.msra.mxu0 0.0
    %455 = vmatprep.mubr.f32.mxu0 0.0
    %456 = vmatmul.mubr.f32.gmra.mxu0 %v122
    %v457 = vpop.f32.mrf.mxu0
    %v458 = vadd.f32 %v389, %v457
    %v459 = vpop.f32.mrf.mxu0
    %460 = vmatprep.mubr.f32.mxu0 0.0
    %461 = vmatmul.mubr.f32.gmra.mxu0 %v125
    %v462 = vpop.f32.mrf.mxu0
    %v463 = vadd.f32 %v389, %v462
    %v464 = vpop.f32.mrf.mxu0
    %465 = vdwg.mxu0
    %466 = vst [vmem:[#allocation15] sm:$0xff] %v458
    %467 = vst [vmem:[#allocation15 + $0x8] sm:$0xff] %v463
    // Predicated region
    $region58: #{tpu_custom_call.1} parent=1 // pred_check
      _
    $region59: #{tpu_custom_call.1} parent=1 // pred_check_branch
      %469 = sbr.rel (0) target = $region61
    $region60: #{tpu_custom_call.1} parent=1 // pred_region
      %s471 = ssub.s32 256, 256
      %472 = vsyncadd [#allocation4], %s471
      %s473 = sshll.u32 [#allocation11], 4
      %s474 = int_to_ptr.vmem [resolvable:$true] %s473
      %479 = dma.vmem_to_hbm [thread:$0]  %s474, 256, %s9, [#allocation4], 128, 128, 8
    $region61: #{tpu_custom_call.1} parent=1 // pred_fallthru
      _
    // Predicated region
    $region62: #{tpu_custom_call.1} parent=1 // pred_check
      _
    $region63: #{tpu_custom_call.1} parent=1 // pred_check_branch
      %481 = sbr.rel (0) target = $region65
    $region64: #{tpu_custom_call.1} parent=1 // pred_region
      %s483 = ssub.s32 256, 256
      %484 = vsyncadd [#allocation13], %s483
      %s485 = sshll.u32 [#allocation12], 4
      %s486 = int_to_ptr.vmem [resolvable:$true] %s485
      %491 = dma.vmem_to_hbm [thread:$0]  %s486, 256, %s10, [#allocation13], 128, 128, 8
    $region65: #{tpu_custom_call.1} parent=1 // pred_fallthru
      _
    // Predicated region
    $region66: #{tpu_custom_call.1} parent=1 // pred_check
      _
    $region67: #{tpu_custom_call.1} parent=1 // pred_check_branch
      %493 = sbr.rel (0) target = $region69
    $region68: #{tpu_custom_call.1} parent=1 // pred_region
      %s495 = ssub.s32 256, 256
      %496 = vsyncadd [#allocation13], %s495
      %s497 = sshll.u32 [#allocation14], 4
      %s498 = int_to_ptr.vmem [resolvable:$true] %s497
      %503 = dma.vmem_to_hbm [thread:$0]  %s498, 256, %s11, [#allocation13], 128, 128, 8
    $region69: #{tpu_custom_call.1} parent=1 // pred_fallthru
      _
    // Predicated region
    $region70: #{tpu_custom_call.1} parent=1 // pred_check
      _
    $region71: #{tpu_custom_call.1} parent=1 // pred_check_branch
      %505 = sbr.rel (0) target = $region73
    $region72: #{tpu_custom_call.1} parent=1 // pred_region
      %s507 = ssub.s32 256, 256
      %508 = vsyncadd [#allocation16], %s507
      %s509 = sshll.u32 [#allocation15], 4
      %s510 = int_to_ptr.vmem [resolvable:$true] %s509
      %515 = dma.vmem_to_hbm [thread:$0]  %s510, 256, %s12, [#allocation16], 128, 128, 8
    $region73: #{tpu_custom_call.1} parent=1 // pred_fallthru
      _
    // Predicated region
    $region74: #{tpu_custom_call.1} parent=1 // pred_check
      _
    $region75: #{tpu_custom_call.1} parent=1 // pred_check_branch
      %517 = sbr.rel (0) target = $region77
    $region76: #{tpu_custom_call.1} parent=1 // pred_region
      %518 = dma.done [#allocation4], 256
    $region77: #{tpu_custom_call.1} parent=1 // pred_fallthru
      _
    // Predicated region
    $region78: #{tpu_custom_call.1} parent=1 // pred_check
      _
    $region79: #{tpu_custom_call.1} parent=1 // pred_check_branch
      %520 = sbr.rel (0) target = $region81
    $region80: #{tpu_custom_call.1} parent=1 // pred_region
      %521 = dma.done [#allocation13], 256
    $region81: #{tpu_custom_call.1} parent=1 // pred_fallthru
      _
    // Predicated region
    $region82: #{tpu_custom_call.1} parent=1 // pred_check
      _
    $region83: #{tpu_custom_call.1} parent=1 // pred_check_branch
      %523 = sbr.rel (0) target = $region85
    $region84: #{tpu_custom_call.1} parent=1 // pred_region
      %524 = dma.done [#allocation13], 256
    $region85: #{tpu_custom_call.1} parent=1 // pred_fallthru
      _
    // Predicated region
    $region86: #{tpu_custom_call.1} parent=1 // pred_check
      _
    $region87: #{tpu_custom_call.1} parent=1 // pred_check_branch
      %526 = sbr.rel (0) target = $region89
    $region88: #{tpu_custom_call.1} parent=1 // pred_region
      %527 = dma.done [#allocation16], 256
    $region89: #{tpu_custom_call.1} parent=1 // pred_fallthru
      _
    %528 = vsyncpa [#allocation3], 1
    %529 = vsyncpa [#allocation6], 1
    %530 = vsyncpa [#allocation9], 1
    %531 = vsyncpa [#allocation4], 1
    %532 = vsyncpa [#allocation13], 1
    %533 = vsyncpa [#allocation16], 1

</llo_original>
